<compile_context>
chip_gen: v6e
topology: v6e:2x2x1
jax: 0.10.0
libtpu: 0.0.40
codegen_flags: <defaults>
</compile_context>

<pallas_src>
import functools

import jax
import jax.numpy as jnp
from jax.experimental import pallas as pl
from jax.experimental.pallas import tpu as pltpu


# --------------------------------------------------------------------------- #
# Kernel
# --------------------------------------------------------------------------- #
def _conv_rows_kernel(x_ref, w_ref, b_ref, o_ref, *, ho, kh):
    """One grid step = `nb` images.

    x_ref : (nb, hp, w*cin)       H-zero-padded, lane-dense image rows (NHWC flat)
    w_ref : (kh*w*cin, wo*cout)   Toeplitz conv weights with circular-W pad folded in
    b_ref : (1, wo*cout)          bias tiled per output column
    o_ref : (nb, ho, wo*cout)     lane-dense output rows (NHWC flat)
    """
    nb = o_ref.shape[0]
    wc = x_ref.shape[-1]

    x = x_ref[...]                                            # (nb, hp, wc)
    # Batched im2col: stack the kh shifted row-windows along lanes.
    x_rows = jnp.concatenate([x[:, i:i + ho, :] for i in range(kh)], axis=-1)
    # ho is a multiple of 8 here, so merging (nb, ho) is layout-preserving.
    x_rows = x_rows.reshape(nb * ho, kh * wc)                 # (nb*ho, K)

    # Whole convolution as ONE MXU GEMM with f32 accumulation.
    acc = jnp.dot(x_rows, w_ref[...], preferred_element_type=jnp.float32)
    acc = acc + b_ref[...].astype(jnp.float32)                # single bias broadcast

    o_ref[...] = acc.reshape(nb, ho, o_ref.shape[-1]).astype(o_ref.dtype)


# --------------------------------------------------------------------------- #
# Weight packing: Toeplitz over the UNPADDED width, circular pad folded in.
# --------------------------------------------------------------------------- #
def _toeplitz_weights(weight_oihw, w, wo, pad_w):
    """Pack OIHW conv weights into (kh*w*cin, wo*cout) for the row-GEMM.

    W_big[(i*w + src)*cin + c, wout*cout + f] =
        sum_{j : (wout + j - pad_w) mod w == src} weight[f, c, i, j]
    i.e. the circular width-padding is absorbed into the weight matrix.
    """
    cout, cin, kh, kw = weight_oihw.shape
    wp = w + 2 * pad_w
    w_hwio = jnp.transpose(weight_oihw, (2, 3, 1, 0))         # (kh, kw, cin, cout)

    wi = jnp.arange(wp)[:, None]                              # padded column
    wo_idx = jnp.arange(wo)[None, :]                          # output column
    j = wi - wo_idx                                           # tap index
    valid = (j >= 0) & (j < kw)
    jc = jnp.clip(j, 0, kw - 1)
    t = w_hwio[:, jc, :, :]                                   # (kh, wp, wo, cin, cout)
    t = t * valid[None, :, :, None, None].astype(w_hwio.dtype)

    # Fold the circular pad: padded column wi reads source column (wi - pad_w) % w.
    src = (jnp.arange(wp) - pad_w) % w
    t_u = jnp.zeros((kh, w, wo, cin, cout), dtype=t.dtype).at[:, src].add(t)

    t_u = jnp.transpose(t_u, (0, 1, 3, 2, 4))                 # (kh, w, cin, wo, cout)
    return t_u.reshape(kh * w * cin, wo * cout)


def _pick_batch_block(n, ho, *, target_m=256, min_grid_steps=2):
    """Largest divisor of n with nb*ho ~ target_m, keeping >= min_grid_steps steps
    when the batch allows it (so both v7x TensorCores get work)."""
    bb = max(1, target_m // max(ho, 1))
    if n >= min_grid_steps:
        bb = min(bb, n // min_grid_steps)
    bb = max(1, min(bb, n))
    while n % bb:
        bb -= 1
    return max(bb, 1)


# --------------------------------------------------------------------------- #
# Wrappers
# --------------------------------------------------------------------------- #
def horiz_circ_conv2d_rows(x_rows, weight_oihw, bias, pad_h, pad_w, *,
                           batch_block=None, compute_dtype=None):
    """Lane-dense API: activations as (N, H, W*Cin) (NHWC flattened on lanes).

    Returns (N, Ho, Wo*Cout) in the same lane-dense layout.
    """
    n, h, wc = x_rows.shape
    cout, cin, kh, kw = weight_oihw.shape
    assert wc % cin == 0
    w = wc // cin

    hp, wp = h + 2 * pad_h, w + 2 * pad_w
    ho, wo = hp - kh + 1, wp - kw + 1
    out_dtype = x_rows.dtype

    # Zero-pad H in the wrapper: fuses with the upstream layout copy.
    x_pad = jnp.pad(x_rows, ((0, 0), (pad_h, pad_h), (0, 0)))

    # One-off constant transforms.
    w_big = _toeplitz_weights(weight_oihw, w, wo, pad_w)      # (kh*w*cin, wo*cout)
    bias_row = jnp.tile(bias, wo).reshape(1, wo * cout)       # lane = wout*cout + f

    if compute_dtype is not None:                             # bf16 path for v6e/v7x
        x_pad = x_pad.astype(compute_dtype)
        w_big = w_big.astype(compute_dtype)

    if batch_block is None:
        batch_block = _pick_batch_block(n, ho)
    assert n % batch_block == 0

    kern = functools.partial(_conv_rows_kernel, ho=ho, kh=kh)

    return pl.pallas_call(
        kern,
        out_shape=jax.ShapeDtypeStruct((n, ho, wo * cout), out_dtype),
        grid_spec=pltpu.PrefetchScalarGridSpec(
            num_scalar_prefetch=0,
            grid=(n // batch_block,),
            in_specs=[
                pl.BlockSpec((batch_block, hp, wc), lambda b: (b, 0, 0)),
                pl.BlockSpec((kh * w * cin, wo * cout), lambda b: (0, 0)),
                pl.BlockSpec((1, wo * cout), lambda b: (0, 0)),
            ],
            out_specs=pl.BlockSpec((batch_block, ho, wo * cout),
                                   lambda b: (b, 0, 0)),
        ),
        compiler_params=pltpu.CompilerParams(
            dimension_semantics=("parallel",)),
    )(x_pad, w_big, bias_row)


def horiz_circ_conv2d(x_nchw, weight_oihw, bias, pad_h, pad_w, **kwargs):
    """NCHW wrapper matching HorizCircPadding(Conv2d(..., padding=(pad_h, pad_w)))."""
    n, cin, h, w = x_nchw.shape
    cout = weight_oihw.shape[0]
    assert cin == weight_oihw.shape[1]

    # Only wrapper-side activation copy (keep activations in rows layout across
    # layers to avoid it entirely).
    x_rows = jnp.transpose(x_nchw, (0, 2, 3, 1)).reshape(n, h, w * cin)
    out = horiz_circ_conv2d_rows(x_rows, weight_oihw, bias, pad_h, pad_w, **kwargs)
    ho, woc = out.shape[1], out.shape[2]
    wo = woc // cout
    return jnp.transpose(out.reshape(n, ho, wo, cout), (0, 3, 1, 2))


# --------------------------------------------------------------------------- #
# Reference + test
# --------------------------------------------------------------------------- #
def _reference(x_nchw, weight_oihw, bias, pad_h, pad_w):
    """Pure-JAX reference with identical padding semantics."""
    x_pad = jnp.pad(x_nchw, ((0, 0), (0, 0), (pad_h, pad_h), (0, 0)))
    x_pad = jnp.pad(x_pad, ((0, 0), (0, 0), (0, 0), (pad_w, pad_w)), mode="wrap")
    out = jax.lax.conv_general_dilated(
        x_pad, weight_oihw, window_strides=(1, 1), padding="VALID",
        dimension_numbers=("NCHW", "OIHW", "NCHW"))
    return out + bias.reshape(1, -1, 1, 1)


if __name__ == "__main__":
    # Synthetic wrapped layer: Conv2d(4, 8, kernel_size=3, padding=(1, 1), stride=1)
    C_IN, C_OUT, KH, KW = 4, 8, 3, 3
    PAD_H, PAD_W = 1, 1
    H = W = 16

    key = jax.random.PRNGKey(0)
    kx, kw_, kb = jax.random.split(key, 3)
    fan_in = C_IN * KH * KW
    bound = 1.0 / (fan_in ** 0.5)
    weight = jax.random.uniform(kw_, (C_OUT, C_IN, KH, KW),
                                minval=-bound, maxval=bound, dtype=jnp.float32)
    bias = jax.random.uniform(kb, (C_OUT,), minval=-bound, maxval=bound,
                              dtype=jnp.float32)

    # N=2: the spec's toy shape. N=16: exercises the batched im2col path
    # (batch_block=8 -> a 128-high MXU GEMM per grid step, 2 parallel steps).
    for n in (2, 16):
        x = jax.random.normal(jax.random.fold_in(kx, n),
                              (n, C_IN, H, W), dtype=jnp.float32)
        out = jax.block_until_ready(horiz_circ_conv2d(x, weight, bias, PAD_H, PAD_W))
        ref = jax.block_until_ready(_reference(x, weight, bias, PAD_H, PAD_W))
        assert out.shape == (n, C_OUT, H, W), out.shape
        err = float(jnp.max(jnp.abs(out - ref)))
        assert err < 1e-4, err

    print("KERNEL_OK")
</pallas_src>

<mosaic_0001>
module attributes {stable_mosaic.version = 11 : i64} {
  func.func @_conv_rows_kernel(%arg0: i32, %arg1: memref<1x18x64xf32, #tpu.memory_space<vmem>>, %arg2: memref<192x128xf32, #tpu.memory_space<vmem>>, %arg3: memref<1x128xf32, #tpu.memory_space<vmem>>, %arg4: memref<1x16x128xf32, #tpu.memory_space<vmem>>) attributes {dimension_semantics = [#tpu.dimension_semantics<parallel>], iteration_bounds = array<i64: 2>, scalar_prefetch = 0 : i64, scratch_operands = 0 : i64, tpu.core_type = #tpu.core_type<tc>, window_params = [{transform_indices = @transform_0, window_bounds = array<i64: 1, 18, 64>}, {pipeline_mode = #tpu.pipeline_mode<synchronous>, transform_indices = @transform_1, window_bounds = array<i64: 192, 128>}, {pipeline_mode = #tpu.pipeline_mode<synchronous>, transform_indices = @transform_2, window_bounds = array<i64: 1, 128>}, {transform_indices = @transform_3, window_bounds = array<i64: 1, 16, 128>}]} {
    %c0 = arith.constant 0 : index
    %c0_0 = arith.constant 0 : index
    %c0_1 = arith.constant 0 : index
    %0 = vector.load %arg1[%c0, %c0_0, %c0_1] : memref<1x18x64xf32, #tpu.memory_space<vmem>>, vector<1x18x64xf32>
    %1 = vector.extract_strided_slice %0 {offsets = [0, 0, 0], sizes = [1, 16, 64], strides = [1, 1, 1]} : vector<1x18x64xf32> to vector<1x16x64xf32>
    %2 = vector.extract_strided_slice %0 {offsets = [0, 1, 0], sizes = [1, 16, 64], strides = [1, 1, 1]} : vector<1x18x64xf32> to vector<1x16x64xf32>
    %3 = vector.extract_strided_slice %0 {offsets = [0, 2, 0], sizes = [1, 16, 64], strides = [1, 1, 1]} : vector<1x18x64xf32> to vector<1x16x64xf32>
    %4 = tpu.concatenate %1, %2, %3 in 2 : vector<1x16x64xf32>, vector<1x16x64xf32>, vector<1x16x64xf32> -> vector<1x16x192xf32>
    %5 = vector.shape_cast %4 : vector<1x16x192xf32> to vector<16x192xf32>
    %c0_2 = arith.constant 0 : index
    %c0_3 = arith.constant 0 : index
    %6 = vector.load %arg2[%c0_2, %c0_3] : memref<192x128xf32, #tpu.memory_space<vmem>>, vector<192x128xf32>
    %cst = arith.constant dense<0.000000e+00> : vector<16x128xf32>
    %7 = tpu.matmul %5, %6, %cst {dimension_numbers = #tpu.dot_dimension_numbers<[1], [0], [0], [1], [0, 0, 1, 1], [], []>} : vector<16x192xf32>, vector<192x128xf32>, vector<16x128xf32> -> vector<16x128xf32>
    %c0_4 = arith.constant 0 : index
    %c0_5 = arith.constant 0 : index
    %8 = vector.load %arg3[%c0_4, %c0_5] : memref<1x128xf32, #tpu.memory_space<vmem>>, vector<1x128xf32>
    %9 = vector.broadcast %8 : vector<1x128xf32> to vector<16x128xf32>
    %10 = arith.addf %7, %9 : vector<16x128xf32>
    %11 = vector.shape_cast %10 : vector<16x128xf32> to vector<1x16x128xf32>
    %c0_6 = arith.constant 0 : index
    %c0_7 = arith.constant 0 : index
    %c0_8 = arith.constant 0 : index
    %12 = vector.load %arg4[%c0_6, %c0_7, %c0_8] : memref<1x16x128xf32, #tpu.memory_space<vmem>>, vector<1x16x128xf32>
    tpu.vector_store %arg4[%c0_6, %c0_7, %c0_8], %11 {strides = array<i32>} : memref<1x16x128xf32, #tpu.memory_space<vmem>>, vector<1x16x128xf32>,
    return
  }
  func.func @transform_0(%arg0: i32) -> (i32, i32, i32) {
    %c0_i32 = arith.constant 0 : i32
    %c0_i32_0 = arith.constant 0 : i32
    %c0_i32_1 = arith.constant 0 : i32
    return %arg0, %c0_i32, %c0_i32_0 : i32, i32, i32
  }
  func.func @transform_1(%arg0: i32) -> (i32, i32) {
    %c0_i32 = arith.constant 0 : i32
    %c0_i32_0 = arith.constant 0 : i32
    %c0_i32_1 = arith.constant 0 : i32
    return %c0_i32, %c0_i32_0 : i32, i32
  }
  func.func @transform_2(%arg0: i32) -> (i32, i32) {
    %c0_i32 = arith.constant 0 : i32
    %c0_i32_0 = arith.constant 0 : i32
    %c0_i32_1 = arith.constant 0 : i32
    return %c0_i32, %c0_i32_0 : i32, i32
  }
  func.func @transform_3(%arg0: i32) -> (i32, i32, i32) {
    %c0_i32 = arith.constant 0 : i32
    %c0_i32_0 = arith.constant 0 : i32
    %c0_i32_1 = arith.constant 0 : i32
    return %arg0, %c0_i32, %c0_i32_0 : i32, i32, i32
  }
}

</mosaic_0001>

<llo_original>
// kernel: tpu_custom_call.1
$region0: #{tpu_custom_call.1}
  #allocation0 [shape = 'u32[]', space=smem, size = 0x4, offset = 0x4, fixed_abs, tag = 'smem constant byte address 0x4 - core index']
  #allocation1 [shape = 'u32[144,128]{1,0:T(1,128)}', space=vmem, size = 0x12000, scoped, tag = 'internal scratch']
  %s0 = inlined_call_operand.vmem [shape: f32[2,18,64], index: 0, kind: input, shape index: {}]
  %s1 = inlined_call_operand.hbm [shape: f32[192,128], index: 1, kind: input, shape index: {}]
  %s2 = inlined_call_operand.vmem [shape: f32[1,128], index: 2, kind: input, shape index: {}]
  %s3 = inlined_call_operand.hbm [shape: f32[2,16,128], index: 3, kind: output, shape index: {}]
  %s4 = sld [smem:[#allocation0]]
  $region49: #{tpu_custom_call.1} parent=0
    _
  %s6 = ssub.s32 1, %s4
  %s7 = scalar_select 0, %s6, %s4
  $region1: #{tpu_custom_call.1} parent=0
    #allocation2 [shape = 'u8[98304]{0}', space=vmem, size = 0x18000, scoped, tag = 'input window, operand 1, single buffered']
    #allocation3 [shape = 's32[2]{0}', space=sflag, size = 0x8, scoped, tag = 'scoped memory for tpu_custom_call.1']
    #allocation4 [shape = 's32[2]{0}', space=sflag, size = 0x8, scoped, tag = 'scoped memory for tpu_custom_call.1']
    #allocation5 [shape = 'u8[16384]{0}', space=vmem, size = 0x4000, scoped, tag = 'output window, operand 0']
    %8 = vsyncpa [#allocation3], 0
    %9 = vsyncpa [#allocation4], 0
    %s10 = scalar_lea.sflag [#allocation4], 1
    %11 = vsyncpa %s10, 0
    loop: start=0, step=1, limit=4
    $region2: #{tpu_custom_call.1} parent=1 // loop_pre_header
      _
    $region3: #{tpu_custom_call.1} parent=1 // loop_header
      %s13 = sphi 0, %s17
      %p14 = scmp.ge.s32.totalorder %s13, 4
      %s23 = sphi 0, %s25
      %s26 = sphi 0, %s23
      %s27 = sphi 0, %s26
      %s43 = sphi 0, %s27
      %s47 = sphi 0, %s47
      %s49 = sphi 0, %s47
      %s50 = sphi 0, %s49
      %s64 = sphi 0, %s50
      %s68 = sphi 0, %s68
      %s70 = sphi 0, %s68
      %s71 = sphi 0, %s70
      %s85 = sphi 0, %s71
      %s91 = sphi 0, %s93
      %s94 = sphi 0, %s91
      %s95 = sphi 0, %s94
      %s111 = sphi 0, %s95
    $region4: #{tpu_custom_call.1} parent=1 // loop_header_branch
      %16 = sbr.rel (%p14) target = $region8
    $region5: #{tpu_custom_call.1} parent=1 // loop_body
      %s18 = ssub.s32 %s13, 1
      %s19 = ssub.s32 %s13, 2
      %s20 = sadd.s32 %s13, 1
      %s21 = ssub.s32 %s13, %s20
      %p22 = scmp.eq.s32.totalorder %s21, 0
      %s24 = sadd.s32 %s23, 1
      %s25 = scalar_select %p22, %s23, %s24
      %p28 = pneg %p22
      %p29 = scmp.eq.s32.totalorder %s13, 1
      %p30 = por %p28, %p29
      %p31 = scmp.ne.s32.totalorder %s23, %s26
      %p32 = scmp.eq.s32.totalorder %s13, 0
      %p33 = por %p31, %p32
      %p34 = scmp.ne.s32.totalorder %s23, %s26
      %p35 = scmp.eq.s32.totalorder %s18, 1
      %p36 = por %p34, %p35
      %p37 = scmp.ne.s32.totalorder %s26, %s27
      %p38 = scmp.eq.s32.totalorder %s18, 0
      %p39 = por %p37, %p38
      %p40 = scmp.ne.s32.totalorder %s26, %s27
      %p41 = scmp.eq.s32.totalorder %s19, 1
      %p42 = por %p40, %p41
      %p44 = scmp.ne.s32.totalorder %s27, %s43
      %p45 = scmp.eq.s32.totalorder %s19, 0
      %p46 = por %p44, %p45
      %s48 = sadd.s32 %s47, 1
      %p51 = scmp.eq.s32.totalorder %s13, 1
      %p52 = scmp.ne.s32.totalorder %s47, %s49
      %p53 = scmp.eq.s32.totalorder %s13, 0
      %p54 = por %p52, %p53
      %p55 = scmp.ne.s32.totalorder %s47, %s49
      %p56 = scmp.eq.s32.totalorder %s18, 1
      %p57 = por %p55, %p56
      %p58 = scmp.ne.s32.totalorder %s49, %s50
      %p59 = scmp.eq.s32.totalorder %s18, 0
      %p60 = por %p58, %p59
      %p61 = scmp.ne.s32.totalorder %s49, %s50
      %p62 = scmp.eq.s32.totalorder %s19, 1
      %p63 = por %p61, %p62
      %p65 = scmp.ne.s32.totalorder %s50, %s64
      %p66 = scmp.eq.s32.totalorder %s19, 0
      %p67 = por %p65, %p66
      %s69 = sadd.s32 %s68, 1
      %p72 = scmp.eq.s32.totalorder %s13, 1
      %p73 = scmp.ne.s32.totalorder %s68, %s70
      %p74 = scmp.eq.s32.totalorder %s13, 0
      %p75 = por %p73, %p74
      %p76 = scmp.ne.s32.totalorder %s68, %s70
      %p77 = scmp.eq.s32.totalorder %s18, 1
      %p78 = por %p76, %p77
      %p79 = scmp.ne.s32.totalorder %s70, %s71
      %p80 = scmp.eq.s32.totalorder %s18, 0
      %p81 = por %p79, %p80
      %p82 = scmp.ne.s32.totalorder %s70, %s71
      %p83 = scmp.eq.s32.totalorder %s19, 1
      %p84 = por %p82, %p83
      %p86 = scmp.ne.s32.totalorder %s71, %s85
      %p87 = scmp.eq.s32.totalorder %s19, 0
      %p88 = por %p86, %p87
      %s89 = ssub.s32 %s13, %s20
      %p90 = scmp.eq.s32.totalorder %s89, 0
      %s92 = sadd.s32 %s91, 1
      %s93 = scalar_select %p90, %s91, %s92
      %p96 = pneg %p90
      %p97 = scmp.eq.s32.totalorder %s13, 1
      %p98 = por %p96, %p97
      %p99 = scmp.ne.s32.totalorder %s91, %s94
      %p100 = scmp.eq.s32.totalorder %s13, 0
      %p101 = por %p99, %p100
      %p102 = scmp.ne.s32.totalorder %s91, %s94
      %p103 = scmp.eq.s32.totalorder %s18, 1
      %p104 = por %p102, %p103
      %p105 = scmp.ne.s32.totalorder %s94, %s95
      %p106 = scmp.eq.s32.totalorder %s18, 0
      %p107 = por %p105, %p106
      %p108 = scmp.ne.s32.totalorder %s94, %s95
      %p109 = scmp.eq.s32.totalorder %s19, 1
      %p110 = por %p108, %p109
      %p112 = scmp.ne.s32.totalorder %s95, %s111
      %p113 = scmp.eq.s32.totalorder %s19, 0
      %p114 = por %p112, %p113
      %p115 = scmp.le.s32.totalorder 1, %s13
      %p116 = scmp.lt.s32.totalorder %s13, 3
      %p117 = pnand %p115, %p116
      %p118 = pneg %p117
      // Predicated region
      $region9: #{tpu_custom_call.1} parent=5 // pred_check
        _
      $region10: #{tpu_custom_call.1} parent=5 // pred_check_branch
        %120 = sbr.rel (%p117) target = $region12
      $region11: #{tpu_custom_call.1} parent=5 // pred_region
        %s121 = ssub.s32 %s13, 1
        // Predicated region
        $region13: #{tpu_custom_call.1} parent=11 // pred_check
          %p122 = pneg %p60
        $region14: #{tpu_custom_call.1} parent=11 // pred_check_branch
          %124 = sbr.rel (%p122) target = $region16
        $region15: #{tpu_custom_call.1} parent=11 // pred_region
          %s126 = ssub.s32 3072, 3072
          %127 = vsyncadd [#allocation3], %s126
          %s128 = sshll.u32 [#allocation2], 4
          %s129 = int_to_ptr.vmem [resolvable:$true] %s128
          %134 = dma.hbm_to_vmem [thread:$0]  %s1, 3072, %s129, [#allocation3], 128, 128, 8
        $region16: #{tpu_custom_call.1} parent=11 // pred_fallthru
          _
        // Predicated region
        $region17: #{tpu_custom_call.1} parent=11 // pred_check
          %p135 = pneg %p81
        $region18: #{tpu_custom_call.1} parent=11 // pred_check_branch
          %137 = sbr.rel (%p135) target = $region20
        $region19: #{tpu_custom_call.1} parent=11 // pred_region
          _
        $region20: #{tpu_custom_call.1} parent=11 // pred_fallthru
          _
      $region12: #{tpu_custom_call.1} parent=5 // pred_fallthru
        _
      %p138 = scmp.lt.s32.totalorder %s13, 2
      // Predicated region
      $region21: #{tpu_custom_call.1} parent=5 // pred_check
        %p139 = pneg %p138
      $region22: #{tpu_custom_call.1} parent=5 // pred_check_branch
        %141 = sbr.rel (%p139) target = $region24
      $region23: #{tpu_custom_call.1} parent=5 // pred_region
        // Predicated region
        $region25: #{tpu_custom_call.1} parent=23 // pred_check
          %p142 = pneg %p33
        $region26: #{tpu_custom_call.1} parent=23 // pred_check_branch
          %144 = sbr.rel (%p142) target = $region28
        $region27: #{tpu_custom_call.1} parent=23 // pred_region
          %p145 = scmp.lt.s32.totalorder %s13, 1
          %s146 = scalar_select %p145, %s13, 1
          %s147 = smul.addr %s146, 3
          %s148 = smul.addr %s147, 8
          %s149 = scalar_lea.vmem %s0, %s148
        $region28: #{tpu_custom_call.1} parent=23 // pred_fallthru
          _
      $region24: #{tpu_custom_call.1} parent=5 // pred_fallthru
        _
      %p150 = scmp.le.s32.totalorder 1, %s13
      %p151 = scmp.lt.s32.totalorder %s13, 3
      %p152 = pnand %p150, %p151
      %p153 = pneg %p152
      // Predicated region
      $region29: #{tpu_custom_call.1} parent=5 // pred_check
        _
      $region30: #{tpu_custom_call.1} parent=5 // pred_check_branch
        %155 = sbr.rel (%p152) target = $region32
      $region31: #{tpu_custom_call.1} parent=5 // pred_region
        %s156 = ssub.s32 %s13, 1
        // Predicated region
        $region33: #{tpu_custom_call.1} parent=31 // pred_check
          %p157 = pneg %p60
        $region34: #{tpu_custom_call.1} parent=31 // pred_check_branch
          %159 = sbr.rel (%p157) target = $region36
        $region35: #{tpu_custom_call.1} parent=31 // pred_region
          %160 = dma.done [#allocation3], 3072
        $region36: #{tpu_custom_call.1} parent=31 // pred_fallthru
          _
        %p161 = scmp.lt.s32.totalorder %s18, 1
        %s162 = scalar_select %p161, %s18, 1
        %s163 = smul.addr %s162, 3
        %s164 = smul.addr %s163, 8
        %s165 = scalar_lea.vmem %s0, %s164
        %p166 = pneg %p39
        %p167 = pneg %p36
        %p168 = pneg %p60
        %p169 = pneg %p57
        %p170 = pneg %p81
        %p171 = pneg %p78
        %p172 = pneg %p107
        %p173 = pneg %p104
        %s174 = sand.u32 %s94, 1
        %s175 = scalar_lea.sflag [#allocation4], %s174
        %s176 = sand.u32 %s94, 1
        %s177 = smul.addr %s176, 16
        %s178 = scalar_lea.vmem [#allocation5], %s177
        %p179 = scmp.lt.s32.totalorder %s18, 1
        %s180 = scalar_select %p179, %s18, 1
        %s181 = smul.addr %s180, 3
        %s182 = smul.addr %s181, 8
        %s183 = scalar_lea.vmem %s0, %s182
        %v184 = vld [vmem:[%s183] sm:$0xff]
        %v185 = vld [vmem:[%s183 + $0x8] sm:$0xff]
        %v186 = vld [vmem:[%s183 + $0x10] sm:$0x3]
        %vm190 = vcmask 1046528
        %v191 = vrot.slane %v184, 1
        %v192 = vrot.slane %v185, 1
        %v193 = vsel %vm190, %v191, %v192
        %v194 = vrot.slane %v186, 1
        %v195 = vsel %vm190, %v192, %v194
        %196 = vrot.lane.b32.xlu0 %v193, 64
        %v197 = vpop.permute.xlu0 %196
        %198 = vrot.lane.b32.xlu0 %v195, 64
        %v199 = vpop.permute.xlu0 %198
        %vm202 = vcmask 1045504
        %v203 = vrot.slane %v184, 2
        %v204 = vrot.slane %v185, 2
        %v205 = vsel %vm202, %v203, %v204
        %v206 = vrot.slane %v186, 2
        %v207 = vsel %vm202, %v204, %v206
        %vm208 = vcmask 523264
        %v209 = vsel %vm208, %v184, %v197
        %v210 = vsel %vm208, %v185, %v199
        %v211 = vld [vmem:[#allocation2] sm:$0xff]
        %v212 = vld [vmem:[#allocation2 + $0x8] sm:$0xff]
        %v213 = vld [vmem:[#allocation2 + $0x10] sm:$0xff]
        %v214 = vld [vmem:[#allocation2 + $0x18] sm:$0xff]
        %v215 = vld [vmem:[#allocation2 + $0x20] sm:$0xff]
        %v216 = vld [vmem:[#allocation2 + $0x28] sm:$0xff]
        %v217 = vld [vmem:[#allocation2 + $0x30] sm:$0xff]
        %v218 = vld [vmem:[#allocation2 + $0x38] sm:$0xff]
        %v219 = vld [vmem:[#allocation2 + $0x40] sm:$0xff]
        %v220 = vld [vmem:[#allocation2 + $0x48] sm:$0xff]
        %v221 = vld [vmem:[#allocation2 + $0x50] sm:$0xff]
        %v222 = vld [vmem:[#allocation2 + $0x58] sm:$0xff]
        %v223 = vld [vmem:[#allocation2 + $0x60] sm:$0xff]
        %v224 = vld [vmem:[#allocation2 + $0x68] sm:$0xff]
        %v225 = vld [vmem:[#allocation2 + $0x70] sm:$0xff]
        %v226 = vld [vmem:[#allocation2 + $0x78] sm:$0xff]
        %v227 = vld [vmem:[#allocation2 + $0x80] sm:$0xff]
        %v228 = vld [vmem:[#allocation2 + $0x88] sm:$0xff]
        %v229 = vld [vmem:[#allocation2 + $0x90] sm:$0xff]
        %v230 = vld [vmem:[#allocation2 + $0x98] sm:$0xff]
        %v231 = vld [vmem:[#allocation2 + $0xa0] sm:$0xff]
        %v232 = vld [vmem:[#allocation2 + $0xa8] sm:$0xff]
        %v233 = vld [vmem:[#allocation2 + $0xb0] sm:$0xff]
        %v234 = vld [vmem:[#allocation2 + $0xb8] sm:$0xff]
        %v235 = vld [vmem:[%s2] sm:$0x1]
        %v237 = vlaneseq
        %v238 = vshrl.u32 %v237, 7
        %v239 = vsub.s32 0, %v238
        %v240 = vrot.slane %v235, %v239
        %v242 = vsel %vm208, %v205, 0
        %v244 = vsel %vm208, %v207, 0
        %246 = vmatprep.subr.mxu0 0.0
        %247 = vmatpush1.msra.mxu0 %v226
        %248 = vmatprep.subr.mxu0 0.0
        %249 = vmatpush1.msra.mxu0 %v225
        %250 = vmatprep.subr.mxu0 0.0
        %251 = vmatpush1.msra.mxu0 %v224
        %252 = vmatprep.subr.mxu0 0.0
        %253 = vmatpush1.msra.mxu0 %v223
        %254 = vmatprep.subr.mxu0 0.0
        %255 = vmatpush1.msra.mxu0 %v222
        %256 = vmatprep.subr.mxu0 0.0
        %257 = vmatpush1.msra.mxu0 %v221
        %258 = vmatprep.subr.mxu0 0.0
        %259 = vmatpush1.msra.mxu0 %v220
        %260 = vmatprep.subr.mxu0 0.0
        %261 = vmatpush1.msra.mxu0 %v219
        %262 = vmatprep.subr.mxu0 0.0
        %263 = vmatpush1.msra.mxu0 %v218
        %264 = vmatprep.subr.mxu0 0.0
        %265 = vmatpush1.msra.mxu0 %v217
        %266 = vmatprep.subr.mxu0 0.0
        %267 = vmatpush1.msra.mxu0 %v216
        %268 = vmatprep.subr.mxu0 0.0
        %269 = vmatpush1.msra.mxu0 %v215
        %270 = vmatprep.subr.mxu0 0.0
        %271 = vmatpush1.msra.mxu0 %v214
        %272 = vmatprep.subr.mxu0 0.0
        %273 = vmatpush1.msra.mxu0 %v213
        %274 = vmatprep.subr.mxu0 0.0
        %275 = vmatpush1.msra.mxu0 %v212
        %276 = vmatprep.subr.mxu0 0.0
        %277 = vmatpush1.msra.mxu0 %v211
        %278 = vmatprep.subr.mxu0 0.0
        %279 = vmatpush2.msra.mxu0 0.0
        %280 = vmatprep.subr.mxu0 0.0
        %281 = vmatpush2.msra.mxu0 0.0
        %282 = vmatprep.subr.mxu0 0.0
        %283 = vmatpush2.msra.mxu0 0.0
        %284 = vmatprep.subr.mxu0 0.0
        %285 = vmatpush2.msra.mxu0 0.0
        %286 = vmatprep.subr.mxu0 0.0
        %287 = vmatpush2.msra.mxu0 0.0
        %288 = vmatprep.subr.mxu0 0.0
        %289 = vmatpush2.msra.mxu0 0.0
        %290 = vmatprep.subr.mxu0 0.0
        %291 = vmatpush2.msra.mxu0 0.0
        %292 = vmatprep.subr.mxu0 0.0
        %293 = vmatpush2.msra.mxu0 0.0
        %294 = vmatprep.subr.mxu0 0.0
        %295 = vmatpush2.msra.mxu0 %v234
        %296 = vmatprep.subr.mxu0 0.0
        %297 = vmatpush2.msra.mxu0 %v233
        %298 = vmatprep.subr.mxu0 0.0
        %299 = vmatpush2.msra.mxu0 %v232
        %300 = vmatprep.subr.mxu0 0.0
        %301 = vmatpush2.msra.mxu0 %v231
        %302 = vmatprep.subr.mxu0 0.0
        %303 = vmatpush2.msra.mxu0 %v230
        %304 = vmatprep.subr.mxu0 0.0
        %305 = vmatpush2.msra.mxu0 %v229
        %306 = vmatprep.subr.mxu0 0.0
        %307 = vmatpush2.msra.mxu0 %v228
        %308 = vmatprep.subr.mxu0 0.0
        %309 = vmatpush2.msra.mxu0 %v227
        %310 = vmatprep.mubr.f32.mxu0 %v242
        %311 = vmatmul.mubr.f32.gmra.mxu0 %v209
        %v312 = vpop.f32.mrf.mxu0
        %v313 = vadd.f32 %v240, %v312
        %v314 = vpop.f32.mrf.mxu0
        %315 = vmatprep.mubr.f32.mxu0 %v244
        %316 = vmatmul.mubr.f32.gmra.mxu0 %v210
        %v317 = vpop.f32.mrf.mxu0
        %v318 = vadd.f32 %v240, %v317
        %v319 = vpop.f32.mrf.mxu0
        %320 = vdwg.mxu0
        %321 = vst [vmem:[%s178] sm:$0xff] %v313
        %322 = vst [vmem:[%s178 + $0x8] sm:$0xff] %v318
        %s323 = sand.u32 %s94, 1
        %s324 = scalar_lea.sflag [#allocation4], %s323
        %s325 = sand.u32 %s94, 1
        %s326 = smul.addr %s325, 16
        %s327 = scalar_lea.vmem [#allocation5], %s326
        // Predicated region
        $region37: #{tpu_custom_call.1} parent=31 // pred_check
          %p328 = pneg %p104
        $region38: #{tpu_custom_call.1} parent=31 // pred_check_branch
          %330 = sbr.rel (%p328) target = $region40
        $region39: #{tpu_custom_call.1} parent=31 // pred_region
          %s332 = ssub.s32 256, 256
          %333 = vsyncadd %s324, %s332
          %s334 = smul.addr %s18, 2
          %s335 = smul.addr %s334, 128
          %s336 = scalar_lea.hbm %s3, %s335
          %s337 = sshll.u32 %s327, 4
          %s338 = int_to_ptr.vmem [resolvable:$true] %s337
          %343 = dma.vmem_to_hbm [thread:$0]  %s338, 256, %s336, %s324, 128, 128, 8
        $region40: #{tpu_custom_call.1} parent=31 // pred_fallthru
          _
      $region32: #{tpu_custom_call.1} parent=5 // pred_fallthru
        _
      %p344 = scmp.le.s32.totalorder 2, %s13
      // Predicated region
      $region41: #{tpu_custom_call.1} parent=5 // pred_check
        %p345 = pneg %p344
      $region42: #{tpu_custom_call.1} parent=5 // pred_check_branch
        %347 = sbr.rel (%p345) target = $region44
      $region43: #{tpu_custom_call.1} parent=5 // pred_region
        %s348 = ssub.s32 %s13, 2
        // Predicated region
        $region45: #{tpu_custom_call.1} parent=43 // pred_check
          %p349 = pneg %p110
        $region46: #{tpu_custom_call.1} parent=43 // pred_check_branch
          %351 = sbr.rel (%p349) target = $region48
        $region47: #{tpu_custom_call.1} parent=43 // pred_region
          %s352 = sand.u32 %s95, 1
          %s353 = scalar_lea.sflag [#allocation4], %s352
          %s354 = sand.u32 %s95, 1
          %s355 = smul.addr %s354, 16
          %s356 = scalar_lea.vmem [#allocation5], %s355
          %357 = dma.done %s353, 256
        $region48: #{tpu_custom_call.1} parent=43 // pred_fallthru
          _
      $region44: #{tpu_custom_call.1} parent=5 // pred_fallthru
        _
    $region6: #{tpu_custom_call.1} parent=1 // loop_footer
      %s17 = sadd.s32 1, %s13
    $region7: #{tpu_custom_call.1} parent=1 // loop_footer_branch
      %12 = sbr.rel target = $region3
    $region8: #{tpu_custom_call.1} parent=1 // loop_exit
      _
    %358 = vsyncpa [#allocation3], 1
    %s359 = scalar_lea.sflag [#allocation3], 1
    %360 = vsyncpa %s359, 1
    %361 = vsyncpa [#allocation4], 1
    %s362 = scalar_lea.sflag [#allocation4], 1
    %363 = vsyncpa %s362, 1

</llo_original>
